<compile_context>
chip_gen: v7x
topology: tpu7x:2x2x1
jax: 0.10.0
libtpu: 0.0.40
codegen_flags: <defaults>
</compile_context>

<pallas_src>
import math

import jax
import jax.numpy as jnp
from jax.experimental import pallas as pl
from jax.experimental.pallas import tpu as pltpu


def _round_up(n: int, m: int) -> int:
    return ((n + m - 1) // m) * m


def _round_down(n: int, m: int) -> int:
    return (n // m) * m


# -----------------------------------------------------------------------------
# Parameter / buffer setup (plain JAX, mirrors the PyTorch __init__).
# -----------------------------------------------------------------------------
def make_positional_encoding(d_model: int, max_len: int = 5000,
                             dtype=jnp.float32) -> jnp.ndarray:
    assert d_model % 2 == 0, "d_model must be even (same as the PyTorch module)"
    position = jnp.arange(0, max_len, dtype=jnp.float32)[:, None]          # (max_len, 1)
    div_term = jnp.exp(
        jnp.arange(0, d_model, 2, dtype=jnp.float32)
        * (-(math.log(10000.0) / d_model)))                                # (d_model/2,)
    pe = jnp.zeros((max_len, d_model), dtype=jnp.float32)
    pe = pe.at[:, 0::2].set(jnp.sin(position * div_term))
    pe = pe.at[:, 1::2].set(jnp.cos(position * div_term))
    # Build the table in the activation dtype (e.g. bf16) => half the PE HBM bytes.
    return pe.astype(dtype)                                                # (max_len, d_model)


# -----------------------------------------------------------------------------
# Kernels
# -----------------------------------------------------------------------------
def _add_kernel(x_ref, pe_ref, o_ref):
    # x_ref/o_ref: (bb, ts, Dc); pe_ref: (ts, Dc) — broadcast over the batch block.
    o_ref[...] = x_ref[...] + pe_ref[...]


def _make_mask_dropout_kernel(scale: float):
    # Portable dropout: keep-mask (uint8) streamed in, fused select+scale.
    def kernel(x_ref, pe_ref, m_ref, o_ref):
        y = x_ref[...] + pe_ref[...]
        keep = m_ref[...] != 0
        o_ref[...] = jnp.where(keep, y * jnp.asarray(scale, y.dtype),
                               jnp.zeros_like(y))
    return kernel


def _make_prng_dropout_kernel(threshold_i32: int, scale: float, n_batch_blocks: int):
    # TPU-only dropout: in-kernel hardware PRNG, no mask HBM stream.
    # keep <=> signed(bits) >= t, with t = round(p*2^32) - 2^31  =>  P(keep) = 1 - p.
    def kernel(seed_ref, x_ref, pe_ref, o_ref):
        y = x_ref[0] + pe_ref[...]                                         # (ts, Dc)
        # Distinct PRNG stream per (s-tile, batch) grid cell.
        pltpu.prng_seed(seed_ref[0]
                        + pl.program_id(0) * n_batch_blocks
                        + pl.program_id(1))
        rows, cols = y.shape
        gen_rows = _round_up(rows, 8)                    # (8,128)-aligned generation
        bits = pltpu.prng_random_bits((gen_rows, cols))
        if bits.dtype != jnp.int32:
            bits = pltpu.bitcast(bits, jnp.int32)        # reinterpret, no convert
        if gen_rows != rows:
            bits = bits[:rows]
        keep = bits >= jnp.int32(threshold_i32)
        o_ref[0] = jnp.where(keep, y * jnp.asarray(scale, y.dtype),
                             jnp.zeros_like(y))
    return kernel


# -----------------------------------------------------------------------------
# Wrapper
# -----------------------------------------------------------------------------
def positional_encoding_forward(x: jnp.ndarray, pe_table: jnp.ndarray, *,
                                dropout_p: float = 0.1,
                                training: bool = False,
                                dropout_seed: int = 0,
                                use_inkernel_prng: bool | None = None) -> jnp.ndarray:
    """x: (B, S, D).  Returns dropout(x + pe[:S]) (eval => identity dropout)."""
    assert x.ndim == 3
    B, S, D = x.shape
    max_len, d_model = pe_table.shape
    assert d_model == D, "pe table d_model mismatch"
    assert S <= max_len, "sequence longer than PE table"

    apply_dropout = bool(training) and float(dropout_p) > 0.0
    if apply_dropout and float(dropout_p) >= 1.0:
        return jnp.zeros_like(x)          # nn.Dropout(p=1): everything dropped

    # PE dtype must match x (avoids per-tile converts and 2x PE HBM bytes).
    if pe_table.dtype != x.dtype:
        pe_table = pe_table.astype(x.dtype)

    itemsize = jnp.dtype(x.dtype).itemsize
    sub_q = max(8, 32 // itemsize)        # sublane quantum: 8 f32 / 16 bf16 / 32 int8

    # ---- lane-dense folding: make the last dim a multiple of 128 -------------
    if D % 128 == 0:
        ch = 1
    else:
        ch = 128 // math.gcd(D, 128)
        if S % ch != 0 or ch > S:
            ch = 1                        # fallback: keep D as-is (lane-sparse)
    Dc, Sc = ch * D, S // ch
    x2 = x.reshape(B, Sc, Dc)             # row-major -> layout-preserving reshape

    rows_full = max_len // ch
    assert Sc <= rows_full
    pe2 = pe_table[: rows_full * ch].reshape(rows_full, Dc)

    # ---- dropout backend selection -------------------------------------------
    if use_inkernel_prng is None:
        use_inkernel_prng = (jax.default_backend() == "tpu")
    use_prng = apply_dropout and use_inkernel_prng

    # ---- tile budget: generation- and mode-aware -----------------------------
    vmem_cap = None
    if jax.default_backend() == "tpu":
        try:
            vmem_cap = pltpu.get_tpu_info().vmem_capacity_bytes
        except Exception:
            vmem_cap = None
    if vmem_cap is not None and vmem_cap >= 100 * (1 << 20):
        tile_budget, vmem_limit = 40 << 20, 64 << 20      # v5e / v6e (128 MiB VMEM)
    else:
        tile_budget, vmem_limit = 14 << 20, 32 << 20      # v7x (64 MiB) / unknown

    # Double-buffered data tiles: 2x x + 2x out + 2x pe, all in x.dtype now.
    bytes_per_row = 6 * Dc * itemsize
    if apply_dropout:
        if use_prng:
            bytes_per_row += 4 * Dc * 4   # prng bits / keep / y full-tile temporaries
        else:
            bytes_per_row += 3 * Dc       # uint8 mask double-buffer + bool temp

    ts_budget = max(sub_q, _round_down(tile_budget // bytes_per_row, sub_q))
    if Sc <= ts_budget:
        ts = Sc                           # single s-tile -> PE is VMEM-resident
        pe_arg = pe2 if (Sc % sub_q == 0) else pe2[:Sc]   # tiny seq: full-extent block
    else:
        ts = ts_budget
        pe_arg = pe2                      # full table; rows picked by index_map
    n_s_tiles = int(pl.cdiv(Sc, ts))

    # Batch blocking: for small tiles (short Sc / narrow D) fold several batches
    # into one block so stores stay dense and grid-step overhead is amortized.
    if use_prng:
        bb = 1                            # keep PRNG tile 2-D and per-(s,b) streams
    else:
        bb = max(1, min(B, ts_budget // max(ts, 1)))
    n_b_blocks = int(pl.cdiv(B, bb))

    # Grid: s-tile outer, batch inner -> PE block index is constant across the
    # inner batch loop, so the pipeliner fetches each PE tile exactly once.
    grid = (n_s_tiles, n_b_blocks)
    x_spec = pl.BlockSpec((bb, ts, Dc), lambda s, b: (b, s, 0))
    pe_spec = pl.BlockSpec((ts, Dc), lambda s, b: (s, 0))
    out_spec = pl.BlockSpec((bb, ts, Dc), lambda s, b: (b, s, 0))

    scale = 1.0 / (1.0 - float(dropout_p)) if apply_dropout else 1.0

    if not apply_dropout:
        kernel = _add_kernel
        in_specs = [x_spec, pe_spec]
        operands = (x2, pe_arg)
        alias = {0: 0}                    # out aliases x (in-place add if donated)
    elif use_prng:
        t = int(round(float(dropout_p) * 4294967296.0)) - 2147483648
        t = max(-2147483648, min(t, 2147483647))
        kernel = _make_prng_dropout_kernel(t, scale, n_b_blocks)
        seed_arr = jnp.asarray([dropout_seed], dtype=jnp.int32)
        in_specs = [pl.BlockSpec(memory_space=pltpu.MemorySpace.SMEM), x_spec, pe_spec]
        operands = (seed_arr, x2, pe_arg)
        alias = {1: 0}                    # x is operand index 1 here
    else:
        key = jax.random.PRNGKey(int(dropout_seed))
        keep_mask = jax.random.bernoulli(
            key, 1.0 - float(dropout_p), (B, Sc, Dc)).astype(jnp.uint8)
        kernel = _make_mask_dropout_kernel(scale)
        mask_spec = pl.BlockSpec((bb, ts, Dc), lambda s, b: (b, s, 0))
        in_specs = [x_spec, pe_spec, mask_spec]
        operands = (x2, pe_arg, keep_mask)
        alias = {0: 0}

    out = pl.pallas_call(
        kernel,
        out_shape=jax.ShapeDtypeStruct((B, Sc, Dc), x.dtype),
        grid=grid,
        in_specs=in_specs,
        out_specs=out_spec,
        input_output_aliases=alias,
        compiler_params=pltpu.CompilerParams(
            # s axis parallel (v7x megacore shards it; per-core PE reuse holds),
            # batch axis arbitrary so its consecutive constant PE index is kept.
            dimension_semantics=(
                "parallel", "parallel" if n_s_tiles == 1 else "arbitrary"),
            vmem_limit_bytes=vmem_limit,
        ),
    )(*operands)

    return out.reshape(B, S, D)


# -----------------------------------------------------------------------------
# Demo / self-test
# -----------------------------------------------------------------------------
if __name__ == "__main__":
    B, S, D = 2, 8, 32
    key = jax.random.PRNGKey(0)
    k1, k2 = jax.random.split(key)

    pe_table = make_positional_encoding(d_model=D, max_len=5000, dtype=jnp.float32)

    fwd = jax.jit(positional_encoding_forward,
                  static_argnames=("dropout_p", "training", "dropout_seed",
                                   "use_inkernel_prng"))

    # ---- eval mode (dropout == identity) -------------------------------------
    x = jax.random.normal(k1, (B, S, D), dtype=jnp.float32)
    ref = x + pe_table[:S][None, :, :]
    out = jax.block_until_ready(fwd(x, pe_table, dropout_p=0.1, training=False))
    assert out.shape == (B, S, D)
    assert jnp.allclose(out, ref, atol=1e-6), "eval-mode mismatch vs reference"

    # ---- training mode (fused dropout) ---------------------------------------
    p = 0.5
    x_tr = jax.random.normal(k2, (B, S, D), dtype=jnp.float32)
    ref_scaled = (x_tr + pe_table[:S][None, :, :]) / (1.0 - p)
    out_tr = jax.block_until_ready(
        fwd(x_tr, pe_table, dropout_p=p, training=True, dropout_seed=123))
    assert out_tr.shape == (B, S, D)
    ok = jnp.isclose(out_tr, ref_scaled, atol=1e-5) | (out_tr == 0.0)
    assert bool(jnp.all(ok)), "training-mode dropout values wrong"
    assert bool(jnp.any(out_tr == 0.0)) and bool(jnp.any(out_tr != 0.0)), \
        "dropout mask looks degenerate"

    print("KERNEL_OK")
</pallas_src>

<mosaic_0001>
module attributes {stable_mosaic.version = 11 : i64} {
  func.func @_add_kernel(%arg0: i32, %arg1: i32, %arg2: memref<2x2x128xf32, #tpu.memory_space<vmem>>, %arg3: memref<2x128xf32, #tpu.memory_space<vmem>>, %arg4: memref<2x2x128xf32, #tpu.memory_space<vmem>>) attributes {dimension_semantics = [#tpu.dimension_semantics<parallel>, #tpu.dimension_semantics<parallel>], iteration_bounds = array<i64: 1, 1>, scalar_prefetch = 0 : i64, scratch_operands = 0 : i64, tpu.core_type = #tpu.core_type<tc>, window_params = [{transform_indices = @transform_0, window_bounds = array<i64: 2, 2, 128>}, {transform_indices = @transform_1, window_bounds = array<i64: 2, 128>}, {transform_indices = @transform_2, window_bounds = array<i64: 2, 2, 128>}]} {
    %c0 = arith.constant 0 : index
    %c0_0 = arith.constant 0 : index
    %c0_1 = arith.constant 0 : index
    %0 = vector.load %arg2[%c0, %c0_0, %c0_1] : memref<2x2x128xf32, #tpu.memory_space<vmem>>, vector<2x2x128xf32>
    %c0_2 = arith.constant 0 : index
    %c0_3 = arith.constant 0 : index
    %1 = vector.load %arg3[%c0_2, %c0_3] : memref<2x128xf32, #tpu.memory_space<vmem>>, vector<2x128xf32>
    %2 = vector.shape_cast %1 : vector<2x128xf32> to vector<1x2x128xf32>
    %3 = vector.broadcast %2 : vector<1x2x128xf32> to vector<2x2x128xf32>
    %4 = arith.addf %0, %3 : vector<2x2x128xf32>
    %c0_4 = arith.constant 0 : index
    %c0_5 = arith.constant 0 : index
    %c0_6 = arith.constant 0 : index
    %5 = vector.load %arg4[%c0_4, %c0_5, %c0_6] : memref<2x2x128xf32, #tpu.memory_space<vmem>>, vector<2x2x128xf32>
    tpu.vector_store %arg4[%c0_4, %c0_5, %c0_6], %4 {strides = array<i32>} : memref<2x2x128xf32, #tpu.memory_space<vmem>>, vector<2x2x128xf32>,
    return
  }
  func.func @transform_0(%arg0: i32, %arg1: i32) -> (i32, i32, i32) {
    %c0_i32 = arith.constant 0 : i32
    %c0_i32_0 = arith.constant 0 : i32
    return %arg1, %arg0, %c0_i32 : i32, i32, i32
  }
  func.func @transform_1(%arg0: i32, %arg1: i32) -> (i32, i32) {
    %c0_i32 = arith.constant 0 : i32
    %c0_i32_0 = arith.constant 0 : i32
    return %arg0, %c0_i32 : i32, i32
  }
  func.func @transform_2(%arg0: i32, %arg1: i32) -> (i32, i32, i32) {
    %c0_i32 = arith.constant 0 : i32
    %c0_i32_0 = arith.constant 0 : i32
    return %arg1, %arg0, %c0_i32 : i32, i32, i32
  }
}

</mosaic_0001>

<llo_original>
// kernel: positional_encoding_forward.1
$region0: #{positional_encoding_forward.1}
  #allocation0 [shape = 'u32[]', space=smem, size = 0x4, offset = 0x4, fixed_abs, tag = 'smem constant byte address 0x4 - core index']
  #allocation1 [shape = 'u32[144,128]{1,0:T(1,128)}', space=vmem, size = 0x12000, scoped, tag = 'internal scratch']
  %s0 = inlined_call_operand.vmem [shape: f32[2,2,128], index: 0, kind: input, shape index: {}, may-alias: {0,2}]
  %s1 = inlined_call_operand.vmem [shape: f32[2,128], index: 1, kind: input, shape index: {}]
  %s2 = inlined_call_operand.vmem [shape: f32[2,2,128], index: 2, kind: output, shape index: {}, may-alias: {0,2}]
  %s3 = sld [smem:[#allocation0]]
  $region18: #{positional_encoding_forward.1} parent=0
    _
  %s5 = ssub.s32 1, %s3
  %s6 = scalar_select 0, %s5, %s3
  // Predicated region
  $region2: #{positional_encoding_forward.1} parent=0 // pred_check
    _
  $region3: #{positional_encoding_forward.1} parent=0 // pred_check_branch
    %8 = sbr.rel (0) target = $region5
  $region4: #{positional_encoding_forward.1} parent=0 // pred_region
    _
  $region5: #{positional_encoding_forward.1} parent=0 // pred_fallthru
    _
  // Predicated region
  $region6: #{positional_encoding_forward.1} parent=0 // pred_check
    _
  $region7: #{positional_encoding_forward.1} parent=0 // pred_check_branch
    %10 = sbr.rel (0) target = $region9
  $region8: #{positional_encoding_forward.1} parent=0 // pred_region
    _
  $region9: #{positional_encoding_forward.1} parent=0 // pred_fallthru
    _
  %v11 = vld [vmem:[%s0] sm:$0x3]
  %v12 = vld [vmem:[%s0 + $0x2] sm:$0x3]
  %v13 = vld [vmem:[%s1] sm:$0x3]
  %v14 = vadd.f32 %v11, %v13
  %v15 = vadd.f32 %v12, %v13
  %16 = vst [vmem:[%s2] sm:$0x3] %v14
  %17 = vst [vmem:[%s2 + $0x2] sm:$0x3] %v15
  // Predicated region
  $region10: #{positional_encoding_forward.1} parent=0 // pred_check
    _
  $region11: #{positional_encoding_forward.1} parent=0 // pred_check_branch
    %19 = sbr.rel (0) target = $region13
  $region12: #{positional_encoding_forward.1} parent=0 // pred_region
    _
  $region13: #{positional_encoding_forward.1} parent=0 // pred_fallthru
    _
  // Predicated region
  $region14: #{positional_encoding_forward.1} parent=0 // pred_check
    _
  $region15: #{positional_encoding_forward.1} parent=0 // pred_check_branch
    %21 = sbr.rel (0) target = $region17
  $region16: #{positional_encoding_forward.1} parent=0 // pred_region
    _
  $region17: #{positional_encoding_forward.1} parent=0 // pred_fallthru
    _

</llo_original>
